<compile_context>
chip_gen: v7x
topology: tpu7x:2x2x1
jax: 0.10.0
libtpu: 0.0.40
codegen_flags: <defaults>
</compile_context>

<pallas_src>
import functools
import math

import jax
import jax.numpy as jnp
from jax.experimental import pallas as pl
from jax.experimental.pallas import tpu as pltpu


def _cdiv(a, b):
    return -(-a // b)


def _round_up(a, m):
    return _cdiv(a, m) * m


def _critic_kernel(layer_dims, mxu_dtype, x_ref, *refs):
    """refs = (w_0, ..., w_{L-2}, w_last_row, b_stacked, out_ref).

    x_ref      : (TB, x_input)   activation tile (pipelined)
    w_i        : (in_i, out_i)   hidden-layer weight, mxu_dtype, VMEM-resident
    w_last_row : (1, d_last)     final-layer weight as a lane-major row, f32
    b_stacked  : (L, max_out)    row i holds layer i's bias in its first out_i lanes, f32
    out_ref    : (TB, 1)
    """
    out_ref = refs[-1]
    b_ref = refs[-2]
    w_last_ref = refs[-3]
    w_refs = refs[:-3]
    n_layers = len(layer_dims) - 1

    h = x_ref[...].astype(jnp.float32)

    # Hidden layers: MXU matmuls fed in mxu_dtype (bf16 halves push/pop traffic),
    # f32 accumulation; bias add + ReLU stay in f32 on the VPU.
    for li in range(n_layers - 1):
        out_dim = layer_dims[li + 1]
        w = w_refs[li][...]                              # (in_i, out_i), VMEM-resident
        b = b_ref[li:li + 1, :out_dim]                   # (1, out_i) static slice, f32
        h = jnp.dot(h.astype(mxu_dtype), w, preferred_element_type=jnp.float32)
        h = jnp.maximum(h + b, 0.0)

    # Final (d_last -> 1) layer off the MXU: VPU multiply + cross-lane (XLU) reduce.
    w_last = w_last_ref[...]                             # (1, d_last), f32
    b_last = b_ref[n_layers - 1:n_layers, 0:1]           # (1, 1), f32
    score = jnp.sum(h * w_last, axis=-1, keepdims=True) + b_last
    out_ref[...] = score.astype(out_ref.dtype)


def critic_forward(x, params, *, block_b=None, mxu_dtype=jnp.bfloat16):
    """x: [B, x_input]. params: list of (w [in,out], b [1,out]) per layer (last out == 1)."""
    B, x_in = x.shape
    n_layers = len(params)
    layer_dims = (x_in,) + tuple(w.shape[1] for w, _ in params)
    assert params[0][0].shape[0] == x_in
    assert layer_dims[-1] == 1

    # ---- batch tile choice --------------------------------------------------
    max_tb = 8192                      # bigger tiles amortize per-step overhead / long DMAs
    if block_b is None:
        # At least 4 grid steps once the batch is big enough (pipelining + megacore),
        # but never tiles smaller than ~1K rows.
        n_tiles = max(_cdiv(B, max_tb), min(4, _cdiv(B, 1024)))
        block_b = _round_up(_cdiv(B, n_tiles), 8)        # sublane-aligned
    else:
        block_b = _round_up(block_b, 8)
    grid = (_cdiv(B, block_b),)
    # No wrapper-side padding: Pallas masks the ragged last block; its garbage rows are
    # never written back to HBM nor returned.

    # ---- weights / bias packing ---------------------------------------------
    mxu_weights = [w.astype(mxu_dtype) for w, _ in params[:-1]]    # [in, out], bf16 by default
    w_last = params[-1][0].reshape(1, -1).astype(jnp.float32)      # (1, d_last), VPU path
    max_out = max(layer_dims[1:])
    b_stack = jnp.zeros((n_layers, max_out), jnp.float32)
    for li, (_, b) in enumerate(params):
        b_stack = b_stack.at[li, : b.shape[-1]].set(b.reshape(-1).astype(jnp.float32))

    in_specs = [pl.BlockSpec((block_b, x_in), lambda i: (i, 0))]    # pipelined x tiles
    for w in mxu_weights:
        in_specs.append(pl.BlockSpec(w.shape, lambda i: (0, 0)))    # VMEM-resident
    in_specs.append(pl.BlockSpec(w_last.shape, lambda i: (0, 0)))   # VMEM-resident
    in_specs.append(pl.BlockSpec(b_stack.shape, lambda i: (0, 0)))  # VMEM-resident

    out_specs = pl.BlockSpec((block_b, 1), lambda i: (i, 0))
    out_shape = jax.ShapeDtypeStruct((B, 1), jnp.float32)

    flops = 2 * B * sum(d0 * d1 for d0, d1 in zip(layer_dims[:-1], layer_dims[1:]))
    bytes_accessed = (x.size * x.dtype.itemsize + B * 4
                      + sum(w.size * w.dtype.itemsize for w in mxu_weights)
                      + (w_last.size + b_stack.size) * 4)

    # Explicit scoped-VMEM budget (v5e default is only 16 MiB); capped at v7x's 64 MiB.
    vmem_need = (2 * block_b * x_in * x.dtype.itemsize              # x double buffer
                 + 2 * block_b * 4                                   # out double buffer
                 + sum(w.size * w.dtype.itemsize for w in mxu_weights)
                 + (w_last.size + b_stack.size) * 4
                 + (2 << 20))                                        # internal-scratch headroom
    vmem_limit = int(min(max(vmem_need, 32 << 20), 64 << 20))

    kernel = functools.partial(_critic_kernel, layer_dims, mxu_dtype)

    out = pl.pallas_call(
        kernel,
        out_shape=out_shape,
        grid=grid,
        in_specs=in_specs,
        out_specs=out_specs,
        compiler_params=pltpu.CompilerParams(
            dimension_semantics=("parallel",),       # megacore split of the batch axis on v7x
            vmem_limit_bytes=vmem_limit),
        cost_estimate=pl.CostEstimate(
            flops=flops, transcendentals=0, bytes_accessed=bytes_accessed),
    )(x, *mxu_weights, w_last, b_stack)

    return out


def init_critic_params(key, x_input, critic_layers):
    """Deterministic init matching the PyTorch module's __init__:
       hidden layers: kaiming_normal_(fan_in, relu) weights, zero bias;
       final layer:   xavier_uniform_ weights, zero bias."""
    dims = [x_input] + list(critic_layers) + [1]
    params = []
    keys = jax.random.split(key, len(dims) - 1)
    for li in range(len(dims) - 1):
        fan_in, fan_out = dims[li], dims[li + 1]
        final = (li == len(dims) - 2)
        if not final:
            # kaiming normal, mode='fan_in', nonlinearity='relu': std = sqrt(2/fan_in)
            std = math.sqrt(2.0 / fan_in)
            w_torch = std * jax.random.normal(keys[li], (fan_out, fan_in), jnp.float32)
        else:
            # xavier uniform: bound = sqrt(6/(fan_in+fan_out))
            bound = math.sqrt(6.0 / (fan_in + fan_out))
            w_torch = jax.random.uniform(keys[li], (fan_out, fan_in), jnp.float32,
                                         minval=-bound, maxval=bound)
        w = jnp.transpose(w_torch)                       # [in, out] for kernel layout
        b = jnp.zeros((1, fan_out), jnp.float32)
        params.append((w, b))
    return params


if __name__ == "__main__":
    key = jax.random.PRNGKey(0)
    k_x, k_p, k_x2 = jax.random.split(key, 3)

    x_input = 64
    critic_layers = [32, 16]
    params = init_critic_params(k_p, x_input, critic_layers)

    def reference(xv, dot_dtype=jnp.float32):
        h = xv.astype(jnp.float32)
        for i, (w, b) in enumerate(params):
            if i < len(params) - 1:
                h = jnp.dot(h.astype(dot_dtype), w.astype(dot_dtype),
                            preferred_element_type=jnp.float32) + b
                h = jnp.maximum(h, 0.0)
            else:
                h = h @ w + b          # final layer stays f32 (VPU path in the kernel)
        return h

    # Small batch, not a multiple of 8 -> single ragged block (no wrapper pad); exact f32 path.
    x_small = jax.random.normal(k_x, (10, x_input), jnp.float32)
    out_small = jax.block_until_ready(
        critic_forward(x_small, params, mxu_dtype=jnp.float32))
    assert out_small.shape == (10, 1)
    assert jnp.allclose(out_small, reference(x_small), atol=1e-5, rtol=1e-5)

    # Larger batch with an explicit tile -> multi-step pipelined grid + ragged last block.
    x_big = jax.random.normal(k_x2, (300, x_input), jnp.float32)
    out_big_f32 = jax.block_until_ready(
        critic_forward(x_big, params, block_b=128, mxu_dtype=jnp.float32))
    assert out_big_f32.shape == (300, 1)
    assert jnp.allclose(out_big_f32, reference(x_big), atol=1e-5, rtol=1e-5)

    # Default bf16-fed MXU path: tight vs. a bf16-emulated reference, loose vs. pure f32.
    out_big_bf16 = jax.block_until_ready(critic_forward(x_big, params, block_b=128))
    assert out_big_bf16.shape == (300, 1)
    assert jnp.allclose(out_big_bf16, reference(x_big, dot_dtype=jnp.bfloat16),
                        atol=1e-2, rtol=1e-2)
    assert jnp.allclose(out_big_bf16, reference(x_big), atol=5e-2, rtol=5e-2)

    print("KERNEL_OK")
</pallas_src>

<mosaic_0001>
module attributes {stable_mosaic.version = 11 : i64} {
  func.func @_critic_kernel(%arg0: i32, %arg1: memref<16x64xf32, #tpu.memory_space<vmem>>, %arg2: memref<64x32xf32, #tpu.memory_space<vmem>>, %arg3: memref<32x16xf32, #tpu.memory_space<vmem>>, %arg4: memref<1x16xf32, #tpu.memory_space<vmem>>, %arg5: memref<3x32xf32, #tpu.memory_space<vmem>>, %arg6: memref<16x1xf32, #tpu.memory_space<vmem>>) attributes {dimension_semantics = [#tpu.dimension_semantics<parallel>], iteration_bounds = array<i64: 1>, scalar_prefetch = 0 : i64, scratch_operands = 0 : i64, tpu.core_type = #tpu.core_type<tc>, window_params = [{transform_indices = @transform_0, window_bounds = array<i64: 16, 64>}, {pipeline_mode = #tpu.pipeline_mode<synchronous>, transform_indices = @transform_1, window_bounds = array<i64: 64, 32>}, {pipeline_mode = #tpu.pipeline_mode<synchronous>, transform_indices = @transform_2, window_bounds = array<i64: 32, 16>}, {pipeline_mode = #tpu.pipeline_mode<synchronous>, transform_indices = @transform_3, window_bounds = array<i64: 1, 16>}, {pipeline_mode = #tpu.pipeline_mode<synchronous>, transform_indices = @transform_4, window_bounds = array<i64: 3, 32>}, {transform_indices = @transform_5, window_bounds = array<i64: 16, 1>}]} {
    %c0 = arith.constant 0 : index
    %c0_0 = arith.constant 0 : index
    %0 = vector.load %arg1[%c0, %c0_0] : memref<16x64xf32, #tpu.memory_space<vmem>>, vector<16x64xf32>
    %c0_1 = arith.constant 0 : index
    %c0_2 = arith.constant 0 : index
    %1 = vector.load %arg2[%c0_1, %c0_2] : memref<64x32xf32, #tpu.memory_space<vmem>>, vector<64x32xf32>
    %c0_3 = arith.constant 0 : index
    %c0_4 = arith.constant 0 : index
    %2 = vector.load %arg5[%c0_3, %c0_4] : memref<3x32xf32, #tpu.memory_space<vmem>>, vector<1x32xf32>
    %cst = arith.constant dense<0.000000e+00> : vector<16x32xf32>
    %3 = tpu.matmul %0, %1, %cst {dimension_numbers = #tpu.dot_dimension_numbers<[1], [0], [0], [1], [0, 0, 1, 1], [], []>} : vector<16x64xf32>, vector<64x32xf32>, vector<16x32xf32> -> vector<16x32xf32>
    %4 = vector.broadcast %2 : vector<1x32xf32> to vector<16x32xf32>
    %5 = arith.addf %3, %4 : vector<16x32xf32>
    %cst_5 = arith.constant 0.000000e+00 : f32
    %6 = vector.broadcast %cst_5 : f32 to vector<16x32xf32>
    %7 = arith.maximumf %5, %6 : vector<16x32xf32>
    %c0_6 = arith.constant 0 : index
    %c0_7 = arith.constant 0 : index
    %8 = vector.load %arg3[%c0_6, %c0_7] : memref<32x16xf32, #tpu.memory_space<vmem>>, vector<32x16xf32>
    %c1 = arith.constant 1 : index
    %c0_8 = arith.constant 0 : index
    %9 = vector.load %arg5[%c1, %c0_8] : memref<3x32xf32, #tpu.memory_space<vmem>>, vector<1x16xf32>
    %cst_9 = arith.constant dense<0.000000e+00> : vector<16x16xf32>
    %10 = tpu.matmul %7, %8, %cst_9 {dimension_numbers = #tpu.dot_dimension_numbers<[1], [0], [0], [1], [0, 0, 1, 1], [], []>} : vector<16x32xf32>, vector<32x16xf32>, vector<16x16xf32> -> vector<16x16xf32>
    %11 = vector.broadcast %9 : vector<1x16xf32> to vector<16x16xf32>
    %12 = arith.addf %10, %11 : vector<16x16xf32>
    %cst_10 = arith.constant 0.000000e+00 : f32
    %13 = vector.broadcast %cst_10 : f32 to vector<16x16xf32>
    %14 = arith.maximumf %12, %13 : vector<16x16xf32>
    %c0_11 = arith.constant 0 : index
    %c0_12 = arith.constant 0 : index
    %15 = vector.load %arg4[%c0_11, %c0_12] : memref<1x16xf32, #tpu.memory_space<vmem>>, vector<1x16xf32>
    %c2 = arith.constant 2 : index
    %c0_13 = arith.constant 0 : index
    %16 = vector.load %arg5[%c2, %c0_13] : memref<3x32xf32, #tpu.memory_space<vmem>>, vector<1x1xf32>
    %17 = vector.broadcast %15 : vector<1x16xf32> to vector<16x16xf32>
    %18 = arith.mulf %14, %17 : vector<16x16xf32>
    %cst_14 = arith.constant dense<0.000000e+00> : vector<16xf32>
    %19 = vector.multi_reduction <add>, %18, %cst_14 [1] : vector<16x16xf32> to vector<16xf32>
    %20 = vector.shape_cast %19 : vector<16xf32> to vector<16x1xf32>
    %21 = vector.broadcast %16 : vector<1x1xf32> to vector<16x1xf32>
    %22 = arith.addf %20, %21 : vector<16x1xf32>
    %c0_15 = arith.constant 0 : index
    %c0_16 = arith.constant 0 : index
    %23 = vector.load %arg6[%c0_15, %c0_16] : memref<16x1xf32, #tpu.memory_space<vmem>>, vector<16x1xf32>
    tpu.vector_store %arg6[%c0_15, %c0_16], %22 {strides = array<i32>} : memref<16x1xf32, #tpu.memory_space<vmem>>, vector<16x1xf32>,
    return
  }
  func.func @transform_0(%arg0: i32) -> (i32, i32) {
    %c0_i32 = arith.constant 0 : i32
    %c0_i32_0 = arith.constant 0 : i32
    return %arg0, %c0_i32 : i32, i32
  }
  func.func @transform_1(%arg0: i32) -> (i32, i32) {
    %c0_i32 = arith.constant 0 : i32
    %c0_i32_0 = arith.constant 0 : i32
    %c0_i32_1 = arith.constant 0 : i32
    return %c0_i32, %c0_i32_0 : i32, i32
  }
  func.func @transform_2(%arg0: i32) -> (i32, i32) {
    %c0_i32 = arith.constant 0 : i32
    %c0_i32_0 = arith.constant 0 : i32
    %c0_i32_1 = arith.constant 0 : i32
    return %c0_i32, %c0_i32_0 : i32, i32
  }
  func.func @transform_3(%arg0: i32) -> (i32, i32) {
    %c0_i32 = arith.constant 0 : i32
    %c0_i32_0 = arith.constant 0 : i32
    %c0_i32_1 = arith.constant 0 : i32
    return %c0_i32, %c0_i32_0 : i32, i32
  }
  func.func @transform_4(%arg0: i32) -> (i32, i32) {
    %c0_i32 = arith.constant 0 : i32
    %c0_i32_0 = arith.constant 0 : i32
    %c0_i32_1 = arith.constant 0 : i32
    return %c0_i32, %c0_i32_0 : i32, i32
  }
  func.func @transform_5(%arg0: i32) -> (i32, i32) {
    %c0_i32 = arith.constant 0 : i32
    %c0_i32_0 = arith.constant 0 : i32
    return %arg0, %c0_i32 : i32, i32
  }
}

</mosaic_0001>

<llo_original>
// kernel: tpu_custom_call.1
$region0: #{tpu_custom_call.1}
  #allocation0 [shape = 'u32[]', space=smem, size = 0x4, offset = 0x4, fixed_abs, tag = 'smem constant byte address 0x4 - core index']
  #allocation1 [shape = 'u32[144,128]{1,0:T(1,128)}', space=vmem, size = 0x12000, scoped, tag = 'internal scratch']
  %s0 = inlined_call_operand.vmem [shape: f32[10,64], index: 0, kind: input, shape index: {}]
  %s1 = inlined_call_operand.vmem [shape: f32[64,32], index: 1, kind: input, shape index: {}]
  %s2 = inlined_call_operand.vmem [shape: f32[32,16], index: 2, kind: input, shape index: {}]
  %s3 = inlined_call_operand.vmem [shape: f32[1,16], index: 3, kind: input, shape index: {}]
  %s4 = inlined_call_operand.vmem [shape: f32[3,32], index: 4, kind: input, shape index: {}]
  %s5 = inlined_call_operand.vmem [shape: f32[10,1], index: 5, kind: output, shape index: {}]
  %s6 = sld [smem:[#allocation0]]
  $region30: #{tpu_custom_call.1} parent=0
    _
  %s8 = ssub.s32 1, %s6
  %s9 = scalar_select 0, %s8, %s6
  // Predicated region
  $region2: #{tpu_custom_call.1} parent=0 // pred_check
    _
  $region3: #{tpu_custom_call.1} parent=0 // pred_check_branch
    %11 = sbr.rel (0) target = $region5
  $region4: #{tpu_custom_call.1} parent=0 // pred_region
    _
  $region5: #{tpu_custom_call.1} parent=0 // pred_fallthru
    _
  // Predicated region
  $region6: #{tpu_custom_call.1} parent=0 // pred_check
    _
  $region7: #{tpu_custom_call.1} parent=0 // pred_check_branch
    %13 = sbr.rel (0) target = $region9
  $region8: #{tpu_custom_call.1} parent=0 // pred_region
    _
  $region9: #{tpu_custom_call.1} parent=0 // pred_fallthru
    _
  // Predicated region
  $region10: #{tpu_custom_call.1} parent=0 // pred_check
    _
  $region11: #{tpu_custom_call.1} parent=0 // pred_check_branch
    %15 = sbr.rel (0) target = $region13
  $region12: #{tpu_custom_call.1} parent=0 // pred_region
    _
  $region13: #{tpu_custom_call.1} parent=0 // pred_fallthru
    _
  // Predicated region
  $region14: #{tpu_custom_call.1} parent=0 // pred_check
    _
  $region15: #{tpu_custom_call.1} parent=0 // pred_check_branch
    %17 = sbr.rel (0) target = $region17
  $region16: #{tpu_custom_call.1} parent=0 // pred_region
    _
  $region17: #{tpu_custom_call.1} parent=0 // pred_fallthru
    _
  // Predicated region
  $region18: #{tpu_custom_call.1} parent=0 // pred_check
    _
  $region19: #{tpu_custom_call.1} parent=0 // pred_check_branch
    %19 = sbr.rel (0) target = $region21
  $region20: #{tpu_custom_call.1} parent=0 // pred_region
    _
  $region21: #{tpu_custom_call.1} parent=0 // pred_fallthru
    _
  %v20 = vld [vmem:[%s0] sm:$0xff]
  %v21 = vld [vmem:[%s0 + $0x8] sm:$0xff]
  %v22 = vld [vmem:[%s1] sm:$0xff]
  %v23 = vld [vmem:[%s1 + $0x8] sm:$0xff]
  %v24 = vld [vmem:[%s1 + $0x10] sm:$0xff]
  %v25 = vld [vmem:[%s1 + $0x18] sm:$0xff]
  %v26 = vld [vmem:[%s1 + $0x20] sm:$0xff]
  %v27 = vld [vmem:[%s1 + $0x28] sm:$0xff]
  %v28 = vld [vmem:[%s1 + $0x30] sm:$0xff]
  %v29 = vld [vmem:[%s1 + $0x38] sm:$0xff]
  %v30 = vld [vmem:[%s4] sm:$0x1]
  %v31 = vlaneseq
  %v32 = vshrl.u32 %v31, 7
  %v33 = vsub.s32 0, %v32
  %v34 = vrot.slane %v30, %v33
  %vm35 = vcmask 523264
  %v37 = vsel %vm35, %v20, 0
  %v40 = vsel %vm35, %v21, 0
  %42 = vmatprep.subr.mxu0 0.0
  %43 = vmatpush1.msra.mxu0 %v22
  %44 = vmatprep.subr.mxu0 0.0
  %45 = vmatpush1.msra.mxu0 %v23
  %46 = vmatprep.subr.mxu0 0.0
  %47 = vmatpush1.msra.mxu0 %v24
  %48 = vmatprep.subr.mxu0 0.0
  %49 = vmatpush1.msra.mxu0 %v25
  %50 = vmatprep.subr.mxu0 0.0
  %51 = vmatpush1.msra.mxu0 %v26
  %52 = vmatprep.subr.mxu0 0.0
  %53 = vmatpush1.msra.mxu0 %v27
  %54 = vmatprep.subr.mxu0 0.0
  %55 = vmatpush1.msra.mxu0 %v28
  %56 = vmatprep.subr.mxu0 0.0
  %57 = vmatpush1.msra.mxu0 %v29
  %58 = vmatprep.subr.mxu0 0.0
  %59 = vmatpush1.msra.mxu0 0.0
  %60 = vmatprep.subr.mxu0 0.0
  %61 = vmatpush1.msra.mxu0 0.0
  %62 = vmatprep.subr.mxu0 0.0
  %63 = vmatpush1.msra.mxu0 0.0
  %64 = vmatprep.subr.mxu0 0.0
  %65 = vmatpush1.msra.mxu0 0.0
  %66 = vmatprep.subr.mxu0 0.0
  %67 = vmatpush1.msra.mxu0 0.0
  %68 = vmatprep.subr.mxu0 0.0
  %69 = vmatpush1.msra.mxu0 0.0
  %70 = vmatprep.subr.mxu0 0.0
  %71 = vmatpush1.msra.mxu0 0.0
  %72 = vmatprep.subr.mxu0 0.0
  %73 = vmatpush1.msra.mxu0 0.0
  %74 = vmatprep.subr.mxu0 0.0
  %75 = vmatpush1.msra.mxu0 0.0
  %76 = vmatprep.subr.mxu0 0.0
  %77 = vmatpush1.msra.mxu0 0.0
  %78 = vmatprep.subr.mxu0 0.0
  %79 = vmatpush1.msra.mxu0 0.0
  %80 = vmatprep.subr.mxu0 0.0
  %81 = vmatpush1.msra.mxu0 0.0
  %82 = vmatprep.subr.mxu0 0.0
  %83 = vmatpush1.msra.mxu0 0.0
  %84 = vmatprep.subr.mxu0 0.0
  %85 = vmatpush1.msra.mxu0 0.0
  %86 = vmatprep.subr.mxu0 0.0
  %87 = vmatpush1.msra.mxu0 0.0
  %88 = vmatprep.subr.mxu0 0.0
  %89 = vmatpush1.msra.mxu0 0.0
  %90 = vmatprep.subr.mxu0 0.0
  %91 = vmatpush1.msra.mxu0 0.0
  %92 = vmatprep.subr.mxu0 0.0
  %93 = vmatpush1.msra.mxu0 0.0
  %94 = vmatprep.subr.mxu0 0.0
  %95 = vmatpush1.msra.mxu0 0.0
  %96 = vmatprep.subr.mxu0 0.0
  %97 = vmatpush1.msra.mxu0 0.0
  %98 = vmatprep.subr.mxu0 0.0
  %99 = vmatpush1.msra.mxu0 0.0
  %100 = vmatprep.subr.mxu0 0.0
  %101 = vmatpush1.msra.mxu0 0.0
  %102 = vmatprep.subr.mxu0 0.0
  %103 = vmatpush1.msra.mxu0 0.0
  %104 = vmatprep.subr.mxu0 0.0
  %105 = vmatpush1.msra.mxu0 0.0
  %106 = vmatprep.mubr.f32.mxu0 0.0
  %107 = vmatmul.mubr.f32.gmra.mrb[0].mxu0 %v37
  %v108 = vpop.f32.mrb[0].mxu0
  %v109 = vadd.f32 %v34, %v108
  %v110 = vpop.f32.mrb[0].mxu0
  %111 = vmatprep.mubr.f32.mxu0 0.0
  %112 = vmatmul.mubr.f32.gmra.mrb[0].mxu0 %v40
  %v113 = vpop.f32.mrb[0].mxu0
  %v114 = vadd.f32 %v34, %v113
  %v115 = vpop.f32.mrb[0].mxu0
  %116 = vdwg.mxu0
  %v117 = vmax.f32 %v109, 0.0
  %v118 = vmax.f32 %v114, 0.0
  %v119 = vld [vmem:[%s2] sm:$0xff]
  %v120 = vld [vmem:[%s2 + $0x8] sm:$0xff]
  %v121 = vld [vmem:[%s2 + $0x10] sm:$0xff]
  %v122 = vld [vmem:[%s2 + $0x18] sm:$0xff]
  %v123 = vld [vmem:[%s4 + $0x1] sm:$0x1]
  %v124 = vlaneseq
  %v125 = vshrl.u32 %v124, 7
  %v126 = vsub.s32 0, %v125
  %v127 = vrot.slane %v123, %v126
  %vm128 = vcmask 261120
  %v130 = vsel %vm128, %v117, 0
  %v133 = vsel %vm128, %v118, 0
  %135 = vmatprep.subr.mxu0 0.0
  %136 = vmatpush1.msra.mxu0 %v119
  %137 = vmatprep.subr.mxu0 0.0
  %138 = vmatpush1.msra.mxu0 %v120
  %139 = vmatprep.subr.mxu0 0.0
  %140 = vmatpush1.msra.mxu0 %v121
  %141 = vmatprep.subr.mxu0 0.0
  %142 = vmatpush1.msra.mxu0 %v122
  %143 = vmatprep.subr.mxu0 0.0
  %144 = vmatpush1.msra.mxu0 0.0
  %145 = vmatprep.subr.mxu0 0.0
  %146 = vmatpush1.msra.mxu0 0.0
  %147 = vmatprep.subr.mxu0 0.0
  %148 = vmatpush1.msra.mxu0 0.0
  %149 = vmatprep.subr.mxu0 0.0
  %150 = vmatpush1.msra.mxu0 0.0
  %151 = vmatprep.subr.mxu0 0.0
  %152 = vmatpush1.msra.mxu0 0.0
  %153 = vmatprep.subr.mxu0 0.0
  %154 = vmatpush1.msra.mxu0 0.0
  %155 = vmatprep.subr.mxu0 0.0
  %156 = vmatpush1.msra.mxu0 0.0
  %157 = vmatprep.subr.mxu0 0.0
  %158 = vmatpush1.msra.mxu0 0.0
  %159 = vmatprep.subr.mxu0 0.0
  %160 = vmatpush1.msra.mxu0 0.0
  %161 = vmatprep.subr.mxu0 0.0
  %162 = vmatpush1.msra.mxu0 0.0
  %163 = vmatprep.subr.mxu0 0.0
  %164 = vmatpush1.msra.mxu0 0.0
  %165 = vmatprep.subr.mxu0 0.0
  %166 = vmatpush1.msra.mxu0 0.0
  %167 = vmatprep.subr.mxu0 0.0
  %168 = vmatpush1.msra.mxu0 0.0
  %169 = vmatprep.subr.mxu0 0.0
  %170 = vmatpush1.msra.mxu0 0.0
  %171 = vmatprep.subr.mxu0 0.0
  %172 = vmatpush1.msra.mxu0 0.0
  %173 = vmatprep.subr.mxu0 0.0
  %174 = vmatpush1.msra.mxu0 0.0
  %175 = vmatprep.subr.mxu0 0.0
  %176 = vmatpush1.msra.mxu0 0.0
  %177 = vmatprep.subr.mxu0 0.0
  %178 = vmatpush1.msra.mxu0 0.0
  %179 = vmatprep.subr.mxu0 0.0
  %180 = vmatpush1.msra.mxu0 0.0
  %181 = vmatprep.subr.mxu0 0.0
  %182 = vmatpush1.msra.mxu0 0.0
  %183 = vmatprep.subr.mxu0 0.0
  %184 = vmatpush1.msra.mxu0 0.0
  %185 = vmatprep.subr.mxu0 0.0
  %186 = vmatpush1.msra.mxu0 0.0
  %187 = vmatprep.subr.mxu0 0.0
  %188 = vmatpush1.msra.mxu0 0.0
  %189 = vmatprep.subr.mxu0 0.0
  %190 = vmatpush1.msra.mxu0 0.0
  %191 = vmatprep.subr.mxu0 0.0
  %192 = vmatpush1.msra.mxu0 0.0
  %193 = vmatprep.subr.mxu0 0.0
  %194 = vmatpush1.msra.mxu0 0.0
  %195 = vmatprep.subr.mxu0 0.0
  %196 = vmatpush1.msra.mxu0 0.0
  %197 = vmatprep.subr.mxu0 0.0
  %198 = vmatpush1.msra.mxu0 0.0
  %199 = vmatprep.mubr.f32.mxu0 0.0
  %200 = vmatmul.mubr.f32.gmra.mrb[0].mxu0 %v130
  %v201 = vpop.f32.mrb[0].mxu0
  %v202 = vadd.f32 %v127, %v201
  %v203 = vpop.f32.mrb[0].mxu0
  %204 = vmatprep.mubr.f32.mxu0 0.0
  %205 = vmatmul.mubr.f32.gmra.mrb[0].mxu0 %v133
  %v206 = vpop.f32.mrb[0].mxu0
  %v207 = vadd.f32 %v127, %v206
  %v208 = vpop.f32.mrb[0].mxu0
  %209 = vdwg.mxu0
  %v210 = vmax.f32 %v202, 0.0
  %v211 = vmax.f32 %v207, 0.0
  %v212 = vld [vmem:[%s3] sm:$0x1]
  %v213 = vld [vmem:[%s4 + $0x2] sm:$0x1]
  %v215 = vlaneseq
  %v216 = vshrl.u32 %v215, 7
  %v217 = vsub.s32 0, %v216
  %v218 = vrot.slane %v212, %v217
  %v220 = vmul.f32 %v210, %v218
  %v221 = vmul.f32 %v211, %v218
  %vm222 = vcmask 130048
  %v223 = vsel %vm222, %v220, 0.0
  %224 = vadd.xlane.f32.xlu0 %v223
  %v225 = vpop.xlane.xlu0 %224
  %v226 = vsel %vm222, %v221, 0.0
  %227 = vadd.xlane.f32.xlu0 %v226
  %v228 = vpop.xlane.xlu0 %227
  %v229 = vlaneseq
  %v230 = vshrl.u32 %v229, 7
  %v231 = vsub.s32 0, %v230
  %v232 = vrot.slane %v213, %v231
  %v233 = vadd.f32 %v225, %v232
  %v234 = vadd.f32 %v228, %v232
  %vm235 = vcmask 7168
  %236 = vst.msk [vmem:[%s5] sm:$0xff] %vm235, %v233
  %237 = vst.msk [vmem:[%s5 + $0x8] sm:$0xff] %vm235, %v234
  // Predicated region
  $region22: #{tpu_custom_call.1} parent=0 // pred_check
    _
  $region23: #{tpu_custom_call.1} parent=0 // pred_check_branch
    %239 = sbr.rel (0) target = $region25
  $region24: #{tpu_custom_call.1} parent=0 // pred_region
    _
  $region25: #{tpu_custom_call.1} parent=0 // pred_fallthru
    _
  // Predicated region
  $region26: #{tpu_custom_call.1} parent=0 // pred_check
    _
  $region27: #{tpu_custom_call.1} parent=0 // pred_check_branch
    %241 = sbr.rel (0) target = $region29
  $region28: #{tpu_custom_call.1} parent=0 // pred_region
    _
  $region29: #{tpu_custom_call.1} parent=0 // pred_fallthru
    _

</llo_original>
